<compile_context>
chip_gen: v6e
topology: v6e:2x2x1
jax: 0.10.0
libtpu: 0.0.40
codegen_flags: <defaults>
</compile_context>

<pallas_src>
import math

import jax
import jax.numpy as jnp
from jax.experimental import pallas as pl
from jax.experimental.pallas import tpu as pltpu


# -----------------------------------------------------------------------------
# FeedForward: y = relu(x @ W1 + b1) @ W2 + b2   (weights stored as (in, out))
# -----------------------------------------------------------------------------
def _ffn_kernel(x_ref, w1_ref, b1_ref, w2_ref, b2_ref, o_ref, acc_ref):
    # Grid = (M//tm, H//th). x:(tm,E) bf16, w1:(E,th) bf16, b1:(1,th) f32,
    # w2:(th,E) bf16, b2:(1,E) f32, o:(tm,E), acc:(tm,E) f32.
    h_idx = pl.program_id(1)

    @pl.when(h_idx == 0)
    def _():
        acc_ref[...] = jnp.zeros_like(acc_ref)

    # First matmul on the MXU with f32 accumulation; bias + ReLU stay in f32.
    h = jnp.dot(x_ref[...], w1_ref[...], preferred_element_type=jnp.float32)
    h = jnp.maximum(h + b1_ref[...], 0.0)
    # Partial second matmul for this hidden tile, accumulated in f32 scratch.
    acc_ref[...] += jnp.dot(h.astype(w2_ref.dtype), w2_ref[...],
                            preferred_element_type=jnp.float32)

    @pl.when(h_idx == pl.num_programs(1) - 1)
    def _():
        o_ref[...] = (acc_ref[...] + b2_ref[...]).astype(o_ref.dtype)


def _pick_tile(total, desired, align):
    """Largest multiple of `align` <= desired that divides `total` (else `total`)."""
    t = min(desired, total)
    t = max(align, (t // align) * align)
    while t > align and total % t != 0:
        t -= align
    if total % t != 0:
        t = total
    return t


def feed_forward(x, w1, b1, w2, b2, *, tm=256, th=512):
    """Fused FFN Pallas kernel. x: (..., E) -> (..., E)."""
    orig_shape = x.shape
    orig_dtype = x.dtype
    E = orig_shape[-1]
    H = w1.shape[1]
    assert w1.shape == (E, H) and w2.shape == (H, E)

    x2 = x.reshape(-1, E)
    M = x2.shape[0]

    # Fixed MXU/lane-aligned row tile; pad M rather than using one giant tile.
    tm = max(128, (tm // 128) * 128)
    num_m = pl.cdiv(M, tm)
    M_pad = num_m * tm
    # Lane-aligned hidden tile dividing H.
    th = _pick_tile(H, th, 128)
    num_h = H // th

    # bf16 matmul inputs; biases stay f32.
    xb = x2.astype(jnp.bfloat16)
    if M_pad != M:
        xb = jnp.pad(xb, ((0, M_pad - M), (0, 0)))
    w1b = w1.astype(jnp.bfloat16)
    w2b = w2.astype(jnp.bfloat16)
    b1f = b1.reshape(1, H).astype(jnp.float32)
    b2f = b2.reshape(1, E).astype(jnp.float32)

    out_itemsize = jnp.dtype(orig_dtype).itemsize
    # VMEM budget: double-buffered input/output tiles + f32 accumulator, with headroom.
    tile_bytes = (2 * (tm * E * 2 + E * th * 2 + th * 4 + th * E * 2 + E * 4
                       + tm * E * out_itemsize)
                  + tm * E * 4)
    vmem_limit = int(min(max(2 * tile_bytes, 16 * 1024 * 1024), 64 * 1024 * 1024))

    cost = pl.CostEstimate(
        flops=4 * M_pad * E * H,
        transcendentals=0,
        bytes_accessed=(M_pad * E * 2                    # x (bf16)
                        + num_m * 2 * E * H * 2          # W1 + W2 per row tile
                        + (H + E) * 4                    # biases
                        + M_pad * E * out_itemsize))     # output

    out = pl.pallas_call(
        _ffn_kernel,
        out_shape=jax.ShapeDtypeStruct((M_pad, E), orig_dtype),
        grid_spec=pltpu.PrefetchScalarGridSpec(
            num_scalar_prefetch=0,
            grid=(num_m, num_h),
            in_specs=[
                pl.BlockSpec((tm, E), lambda i, h: (i, 0)),   # x row tile
                pl.BlockSpec((E, th), lambda i, h: (0, h)),   # W1 hidden tile
                pl.BlockSpec((1, th), lambda i, h: (0, h)),   # b1 hidden tile
                pl.BlockSpec((th, E), lambda i, h: (h, 0)),   # W2 hidden tile
                pl.BlockSpec((1, E), lambda i, h: (0, 0)),    # b2
            ],
            out_specs=pl.BlockSpec((tm, E), lambda i, h: (i, 0)),
            scratch_shapes=[pltpu.VMEM((tm, E), jnp.float32)],
        ),
        compiler_params=pltpu.CompilerParams(
            dimension_semantics=("parallel", "arbitrary"),
            vmem_limit_bytes=vmem_limit),
        cost_estimate=cost,
    )(xb, w1b, b1f, w2b, b2f)

    if M_pad != M:
        out = out[:M]
    return out.reshape(orig_shape)


# -----------------------------------------------------------------------------
# Multi-head scaled-dot-product attention (all heads fused, one grid step / batch)
# -----------------------------------------------------------------------------
def _make_sdpa_kernel(num_heads, dk, dv, scale):
    def _sdpa_kernel(q_ref, k_ref, v_ref, m_ref, o_ref):
        # q:(1,Lq,H*dk) k:(1,Lk,H*dk) v:(1,Lk,H*dv) m:(1,Lq,Lk) i32 -> o:(1,Lq,H*dv)
        neg = jnp.float32(-1e10)
        masked = m_ref[0] != 0                      # (Lq, Lk), hoisted out of head loop
        for h in range(num_heads):                  # static loop; heads = lane slices
            q = q_ref[0, :, h * dk:(h + 1) * dk]    # (Lq, dk)
            k = k_ref[0, :, h * dk:(h + 1) * dk]    # (Lk, dk)
            v = v_ref[0, :, h * dv:(h + 1) * dv]    # (Lk, dv)
            s = jnp.einsum('qd,kd->qk', q, k, preferred_element_type=jnp.float32)
            # Match PyTorch: masked_fill(-1e10) BEFORE dividing by sqrt(dk).
            s = jnp.where(masked, neg, s) * scale
            s = s - jnp.max(s, axis=-1, keepdims=True)
            p = jnp.exp(s)
            p = p / jnp.sum(p, axis=-1, keepdims=True)
            o = jnp.einsum('qk,kd->qd', p, v, preferred_element_type=jnp.float32)
            o_ref[0, :, h * dv:(h + 1) * dv] = o.astype(o_ref.dtype)
    return _sdpa_kernel


def multi_head_attention(Q, K, V, num_heads, dk, dv, mask=None):
    """Q:(B,Lq,H*dk) K:(B,Lk,H*dk) V:(B,Lk,H*dv) -> (B,Lq,H*dv). No XLA transposes."""
    B, Lq, _ = Q.shape
    Lk = K.shape[1]

    if mask is None:
        mask_i32 = jnp.zeros((1, Lq, Lk), jnp.int32)
    elif mask.ndim == 2:
        mask_i32 = mask.astype(jnp.int32)[None]
    else:
        mask_i32 = mask.astype(jnp.int32)
    mB = mask_i32.shape[0]
    mask_idx = (lambda b: (0, 0, 0)) if mB == 1 else (lambda b: (b, 0, 0))

    return pl.pallas_call(
        _make_sdpa_kernel(num_heads, dk, dv, 1.0 / math.sqrt(dk)),
        out_shape=jax.ShapeDtypeStruct((B, Lq, num_heads * dv), Q.dtype),
        grid_spec=pltpu.PrefetchScalarGridSpec(
            num_scalar_prefetch=0,
            grid=(B,),
            in_specs=[
                pl.BlockSpec((1, Lq, num_heads * dk), lambda b: (b, 0, 0)),
                pl.BlockSpec((1, Lk, num_heads * dk), lambda b: (b, 0, 0)),
                pl.BlockSpec((1, Lk, num_heads * dv), lambda b: (b, 0, 0)),
                pl.BlockSpec((1, Lq, Lk), mask_idx),
            ],
            out_specs=pl.BlockSpec((1, Lq, num_heads * dv), lambda b: (b, 0, 0)),
        ),
        compiler_params=pltpu.CompilerParams(
            dimension_semantics=("parallel",)),
    )(Q, K, V, mask_i32)


# -----------------------------------------------------------------------------
# Encoder wrapper (residuals / whole-tensor layer_norm / projections in plain JAX)
# -----------------------------------------------------------------------------
def full_layer_norm(x, eps=1e-5):
    # F.layer_norm(x, normalized_shape=x.shape): normalize over the WHOLE tensor.
    mu = jnp.mean(x)
    var = jnp.mean(jnp.square(x - mu))
    return (x - mu) * jax.lax.rsqrt(var + eps)


def self_attention(x, p, num_heads, dk, dv, mask=None):
    q = x @ p['wq'] + p['bq']
    k = x @ p['wk'] + p['bk']
    v = x @ p['wv'] + p['bv']
    return multi_head_attention(q, k, v, num_heads, dk, dv, mask)


def encoder_block(x, p, num_heads, dk, dv, mask=None, *, tm=256, th=512):
    a = self_attention(x, p, num_heads, dk, dv, mask)       # dropout == identity
    x = full_layer_norm(x + a)
    f = feed_forward(x, p['w1'], p['b1'], p['w2'], p['b2'], tm=tm, th=th)
    return full_layer_norm(x + f)


def encoder_forward(x, params, num_heads, dk, dv, padding_mask=None, *, tm=256, th=512):
    for p in params:
        x = encoder_block(x, p, num_heads, dk, dv, padding_mask, tm=tm, th=th)
    return x


# -----------------------------------------------------------------------------
# Pure-JAX reference (f32) and parameter init
# -----------------------------------------------------------------------------
def _ref_mha(Q, K, V, num_heads, dk, dv, mask=None):
    B, Lq, _ = Q.shape
    Lk = K.shape[1]
    q = Q.reshape(B, Lq, num_heads, dk).transpose(0, 2, 1, 3)
    k = K.reshape(B, Lk, num_heads, dk).transpose(0, 2, 1, 3)
    v = V.reshape(B, Lk, num_heads, dv).transpose(0, 2, 1, 3)
    s = jnp.einsum('bhqd,bhkd->bhqk', q, k)
    if mask is not None:
        m = mask if mask.ndim == 2 else mask[:, None]
        s = jnp.where(m != 0, -1e10, s)
    s = s / math.sqrt(dk)
    p = jax.nn.softmax(s, axis=-1)
    o = jnp.einsum('bhqk,bhkd->bhqd', p, v)
    return o.transpose(0, 2, 1, 3).reshape(B, Lq, num_heads * dv)


def encoder_reference(x, params, num_heads, dk, dv, padding_mask=None):
    for p in params:
        q = x @ p['wq'] + p['bq']
        k = x @ p['wk'] + p['bk']
        v = x @ p['wv'] + p['bv']
        a = _ref_mha(q, k, v, num_heads, dk, dv, padding_mask)
        x = full_layer_norm(x + a)
        f = jnp.maximum(x @ p['w1'] + p['b1'], 0.0) @ p['w2'] + p['b2']
        x = full_layer_norm(x + f)
    return x


def _linear_init(key, fan_in, fan_out, dtype=jnp.float32):
    kw, kb = jax.random.split(key)
    lim = 1.0 / math.sqrt(fan_in)
    w = jax.random.uniform(kw, (fan_in, fan_out), dtype, minval=-lim, maxval=lim)
    b = jax.random.uniform(kb, (fan_out,), dtype, minval=-lim, maxval=lim)
    return w, b


def init_encoder_params(key, num_layers, embedding_dim, dk, dv, num_heads):
    E, H = embedding_dim, 4 * embedding_dim
    params = []
    for lk in jax.random.split(key, num_layers):
        k1, k2, k3, k4, k5 = jax.random.split(lk, 5)
        wq, bq = _linear_init(k1, E, dk * num_heads)
        wk, bk = _linear_init(k2, E, dk * num_heads)
        wv, bv = _linear_init(k3, E, dv * num_heads)
        w1, b1 = _linear_init(k4, E, H)
        w2, b2 = _linear_init(k5, H, E)
        params.append(dict(wq=wq, bq=bq, wk=wk, bk=bk, wv=wv, bv=bv,
                           w1=w1, b1=b1, w2=w2, b2=b2))
    return params


if __name__ == "__main__":
    key = jax.random.PRNGKey(0)
    kx, kp = jax.random.split(key)

    # Small Encoder config; E (= H*dv) a multiple of 128 so both kernels are lane-dense.
    num_layers, E, num_heads, dk, dv = 2, 128, 4, 32, 32
    B, S = 2, 128            # M = B*S = 256
    tm, th = 128, 256        # 2 row tiles x 2 hidden tiles -> exercises pipeline + acc

    x = jax.random.normal(kx, (B, S, E), dtype=jnp.float32)
    params = init_encoder_params(kp, num_layers, E, dk, dv, num_heads)

    # --- unit check: fused FFN kernel vs bf16-matched JAX reference -----------
    p0 = params[0]
    x2 = x.reshape(-1, E)
    y_ffn = jax.block_until_ready(
        feed_forward(x2, p0['w1'], p0['b1'], p0['w2'], p0['b2'], tm=tm, th=th))
    hb = jnp.dot(x2.astype(jnp.bfloat16), p0['w1'].astype(jnp.bfloat16),
                 preferred_element_type=jnp.float32) + p0['b1']
    y_ffn_ref = jnp.dot(jnp.maximum(hb, 0.0).astype(jnp.bfloat16),
                        p0['w2'].astype(jnp.bfloat16),
                        preferred_element_type=jnp.float32) + p0['b2']
    assert jnp.allclose(y_ffn, y_ffn_ref.astype(y_ffn.dtype),
                        atol=5e-3, rtol=5e-3), "FFN kernel mismatch"

    # --- unit check: fused SDPA kernel vs plain-JAX attention -----------------
    q = x @ p0['wq'] + p0['bq']
    k = x @ p0['wk'] + p0['bk']
    v = x @ p0['wv'] + p0['bv']
    a_pal = jax.block_until_ready(multi_head_attention(q, k, v, num_heads, dk, dv))
    a_ref = _ref_mha(q, k, v, num_heads, dk, dv)
    assert jnp.allclose(a_pal, a_ref, atol=2e-2, rtol=2e-2), "attention kernel mismatch"

    # --- end-to-end Encoder forward (jitted once) ------------------------------
    enc_fn = jax.jit(lambda xx: encoder_forward(xx, params, num_heads, dk, dv,
                                                tm=tm, th=th))
    y = jax.block_until_ready(enc_fn(x))
    y_ref = encoder_reference(x, params, num_heads, dk, dv)
    assert y.shape == (B, S, E)
    assert float(jnp.max(jnp.abs(y - y_ref))) < 1e-1, "encoder output mismatch"

    print("KERNEL_OK")
</pallas_src>

<mosaic_0001>
module attributes {stable_mosaic.version = 11 : i64} {
  func.func @_ffn_kernel(%arg0: i32, %arg1: i32, %arg2: memref<128x128xbf16, #tpu.memory_space<vmem>>, %arg3: memref<128x256xbf16, #tpu.memory_space<vmem>>, %arg4: memref<1x256xf32, #tpu.memory_space<vmem>>, %arg5: memref<256x128xbf16, #tpu.memory_space<vmem>>, %arg6: memref<1x128xf32, #tpu.memory_space<vmem>>, %arg7: memref<128x128xf32, #tpu.memory_space<vmem>>, %arg8: memref<128x128xf32, #tpu.memory_space<vmem>>) attributes {dimension_semantics = [#tpu.dimension_semantics<parallel>, #tpu.dimension_semantics<arbitrary>], iteration_bounds = array<i64: 2, 2>, scalar_prefetch = 0 : i64, scratch_operands = 1 : i64, tpu.core_type = #tpu.core_type<tc>, window_params = [{transform_indices = @transform_0, window_bounds = array<i64: 128, 128>}, {transform_indices = @transform_1, window_bounds = array<i64: 128, 256>}, {transform_indices = @transform_2, window_bounds = array<i64: 1, 256>}, {transform_indices = @transform_3, window_bounds = array<i64: 256, 128>}, {pipeline_mode = #tpu.pipeline_mode<synchronous>, transform_indices = @transform_4, window_bounds = array<i64: 1, 128>}, {transform_indices = @transform_5, window_bounds = array<i64: 128, 128>}]} {
    %c0_i32 = arith.constant 0 : i32
    %0 = arith.cmpi eq, %arg1, %c0_i32 : i32
    %1 = arith.extui %0 : i1 to i32
    %c0_i32_0 = arith.constant 0 : i32
    %2 = arith.cmpi ne, %1, %c0_i32_0 : i32
    scf.if %2 {
      %cst_15 = arith.constant 0.000000e+00 : f32
      %20 = vector.broadcast %cst_15 : f32 to vector<128x128xf32>
      %c0_16 = arith.constant 0 : index
      %c0_17 = arith.constant 0 : index
      %21 = vector.load %arg8[%c0_16, %c0_17] : memref<128x128xf32, #tpu.memory_space<vmem>>, vector<128x128xf32>
      tpu.vector_store %arg8[%c0_16, %c0_17], %20 {strides = array<i32>} : memref<128x128xf32, #tpu.memory_space<vmem>>, vector<128x128xf32>,
    } else {
    }
    %c0 = arith.constant 0 : index
    %c0_1 = arith.constant 0 : index
    %3 = vector.load %arg2[%c0, %c0_1] : memref<128x128xbf16, #tpu.memory_space<vmem>>, vector<128x128xbf16>
    %c0_2 = arith.constant 0 : index
    %c0_3 = arith.constant 0 : index
    %4 = vector.load %arg3[%c0_2, %c0_3] : memref<128x256xbf16, #tpu.memory_space<vmem>>, vector<128x256xbf16>
    %cst = arith.constant dense<0.000000e+00> : vector<128x256xf32>
    %5 = tpu.matmul %3, %4, %cst {dimension_numbers = #tpu.dot_dimension_numbers<[1], [0], [0], [1], [0, 0, 1, 1], [], []>} : vector<128x128xbf16>, vector<128x256xbf16>, vector<128x256xf32> -> vector<128x256xf32>
    %c0_4 = arith.constant 0 : index
    %c0_5 = arith.constant 0 : index
    %6 = vector.load %arg4[%c0_4, %c0_5] : memref<1x256xf32, #tpu.memory_space<vmem>>, vector<1x256xf32>
    %7 = vector.broadcast %6 : vector<1x256xf32> to vector<128x256xf32>
    %8 = arith.addf %5, %7 : vector<128x256xf32>
    %cst_6 = arith.constant 0.000000e+00 : f32
    %9 = vector.broadcast %cst_6 : f32 to vector<128x256xf32>
    %10 = arith.maximumf %8, %9 : vector<128x256xf32>
    %c0_7 = arith.constant 0 : index
    %c0_8 = arith.constant 0 : index
    %11 = vector.load %arg8[%c0_7, %c0_8] : memref<128x128xf32, #tpu.memory_space<vmem>>, vector<128x128xf32>
    %12 = arith.truncf %10 : vector<128x256xf32> to vector<128x256xbf16>
    %c0_9 = arith.constant 0 : index
    %c0_10 = arith.constant 0 : index
    %13 = vector.load %arg5[%c0_9, %c0_10] : memref<256x128xbf16, #tpu.memory_space<vmem>>, vector<256x128xbf16>
    %cst_11 = arith.constant dense<0.000000e+00> : vector<128x128xf32>
    %14 = tpu.matmul %12, %13, %cst_11 {dimension_numbers = #tpu.dot_dimension_numbers<[1], [0], [0], [1], [0, 0, 1, 1], [], []>} : vector<128x256xbf16>, vector<256x128xbf16>, vector<128x128xf32> -> vector<128x128xf32>
    %15 = arith.addf %11, %14 : vector<128x128xf32>
    %c0_12 = arith.constant 0 : index
    %c0_13 = arith.constant 0 : index
    %16 = vector.load %arg8[%c0_12, %c0_13] : memref<128x128xf32, #tpu.memory_space<vmem>>, vector<128x128xf32>
    tpu.vector_store %arg8[%c0_12, %c0_13], %15 {strides = array<i32>} : memref<128x128xf32, #tpu.memory_space<vmem>>, vector<128x128xf32>,
    %c1_i32 = arith.constant 1 : i32
    %17 = arith.cmpi eq, %arg1, %c1_i32 : i32
    %18 = arith.extui %17 : i1 to i32
    %c0_i32_14 = arith.constant 0 : i32
    %19 = arith.cmpi ne, %18, %c0_i32_14 : i32
    scf.if %19 {
      %c0_15 = arith.constant 0 : index
      %c0_16 = arith.constant 0 : index
      %20 = vector.load %arg8[%c0_15, %c0_16] : memref<128x128xf32, #tpu.memory_space<vmem>>, vector<128x128xf32>
      %c0_17 = arith.constant 0 : index
      %c0_18 = arith.constant 0 : index
      %21 = vector.load %arg6[%c0_17, %c0_18] : memref<1x128xf32, #tpu.memory_space<vmem>>, vector<1x128xf32>
      %22 = vector.broadcast %21 : vector<1x128xf32> to vector<128x128xf32>
      %23 = arith.addf %20, %22 : vector<128x128xf32>
      %c0_19 = arith.constant 0 : index
      %c0_20 = arith.constant 0 : index
      %24 = vector.load %arg7[%c0_19, %c0_20] : memref<128x128xf32, #tpu.memory_space<vmem>>, vector<128x128xf32>
      tpu.vector_store %arg7[%c0_19, %c0_20], %23 {strides = array<i32>} : memref<128x128xf32, #tpu.memory_space<vmem>>, vector<128x128xf32>,
    } else {
    }
    return
  }
  func.func @transform_0(%arg0: i32, %arg1: i32) -> (i32, i32) {
    %c0_i32 = arith.constant 0 : i32
    %c0_i32_0 = arith.constant 0 : i32
    return %arg0, %c0_i32 : i32, i32
  }
  func.func @transform_1(%arg0: i32, %arg1: i32) -> (i32, i32) {
    %c0_i32 = arith.constant 0 : i32
    %c0_i32_0 = arith.constant 0 : i32
    return %c0_i32, %arg1 : i32, i32
  }
  func.func @transform_2(%arg0: i32, %arg1: i32) -> (i32, i32) {
    %c0_i32 = arith.constant 0 : i32
    %c0_i32_0 = arith.constant 0 : i32
    return %c0_i32, %arg1 : i32, i32
  }
  func.func @transform_3(%arg0: i32, %arg1: i32) -> (i32, i32) {
    %c0_i32 = arith.constant 0 : i32
    %c0_i32_0 = arith.constant 0 : i32
    return %arg1, %c0_i32 : i32, i32
  }
  func.func @transform_4(%arg0: i32, %arg1: i32) -> (i32, i32) {
    %c0_i32 = arith.constant 0 : i32
    %c0_i32_0 = arith.constant 0 : i32
    %c0_i32_1 = arith.constant 0 : i32
    return %c0_i32, %c0_i32_0 : i32, i32
  }
  func.func @transform_5(%arg0: i32, %arg1: i32) -> (i32, i32) {
    %c0_i32 = arith.constant 0 : i32
    %c0_i32_0 = arith.constant 0 : i32
    return %arg0, %c0_i32 : i32, i32
  }
}

</mosaic_0001>

<llo_original>
// kernel: tpu_custom_call.1
$region0: #{tpu_custom_call.1}
  #allocation0 [shape = 'u32[]', space=smem, size = 0x4, offset = 0x4, fixed_abs, tag = 'smem constant byte address 0x4 - core index']
  #allocation1 [shape = 'u32[144,128]{1,0:T(1,128)}', space=vmem, size = 0x12000, scoped, tag = 'internal scratch']
  #allocation2 [shape = 'f32[128,128]{1,0:T(8,128)}', space=vmem, size = 0x10000, scoped, tag = 'scratch operand']
  %s0 = inlined_call_operand.hbm [shape: bf16[256,128], index: 0, kind: input, shape index: {}]
  %s1 = inlined_call_operand.hbm [shape: bf16[128,512], index: 1, kind: input, shape index: {}]
  %s2 = inlined_call_operand.hbm [shape: f32[1,512], index: 2, kind: input, shape index: {}]
  %s3 = inlined_call_operand.hbm [shape: bf16[512,128], index: 3, kind: input, shape index: {}]
  %s4 = inlined_call_operand.vmem [shape: f32[1,128], index: 4, kind: input, shape index: {}]
  %s5 = inlined_call_operand.hbm [shape: f32[256,128], index: 5, kind: output, shape index: {}]
  %s6 = sld [smem:[#allocation0]]
  $region77: #{tpu_custom_call.1} parent=0
    _
  %s8 = ssub.s32 1, %s6
  %s9 = scalar_select 0, %s8, %s6
  $region1: #{tpu_custom_call.1} parent=0
    #allocation3 [shape = 'u8[65536]{0}', space=vmem, size = 0x10000, scoped, tag = 'input window, operand 0']
    #allocation4 [shape = 's32[2]{0}', space=sflag, size = 0x8, scoped, tag = 'scoped memory for tpu_custom_call.1']
    #allocation5 [shape = 's32[2]{0}', space=sflag, size = 0x8, scoped, tag = 'scoped memory for tpu_custom_call.1']
    #allocation6 [shape = 'u8[131072]{0}', space=vmem, size = 0x20000, scoped, tag = 'input window, operand 1']
    #allocation7 [shape = 's32[2]{0}', space=sflag, size = 0x8, scoped, tag = 'scoped memory for tpu_custom_call.1']
    #allocation8 [shape = 'u8[2048]{0}', space=vmem, size = 0x800, scoped, tag = 'input window, operand 2']
    #allocation9 [shape = 'u8[131072]{0}', space=vmem, size = 0x20000, scoped, tag = 'input window, operand 3']
    #allocation10 [shape = 's32[2]{0}', space=sflag, size = 0x8, scoped, tag = 'scoped memory for tpu_custom_call.1']
    #allocation11 [shape = 'u8[131072]{0}', space=vmem, size = 0x20000, scoped, tag = 'output window, operand 0']
    %10 = vsyncpa [#allocation4], 0
    %s11 = scalar_lea.sflag [#allocation4], 1
    %12 = vsyncpa %s11, 0
    %13 = vsyncpa [#allocation7], 0
    %s14 = scalar_lea.sflag [#allocation7], 1
    %15 = vsyncpa %s14, 0
    %16 = vsyncpa [#allocation10], 0
    %s17 = scalar_lea.sflag [#allocation10], 1
    %18 = vsyncpa %s17, 0
    %19 = vsyncpa [#allocation5], 0
    %s20 = scalar_lea.sflag [#allocation5], 1
    %21 = vsyncpa %s20, 0
    loop: start=0, step=1, limit=6
    $region2: #{tpu_custom_call.1} parent=1 // loop_pre_header
      _
    $region3: #{tpu_custom_call.1} parent=1 // loop_header
      %s23 = sphi 0, %s27
      %p24 = scmp.ge.s32.totalorder %s23, 6
      %s30 = sphi 0, %s42
      %s31 = sphi 0, %s38
      %s32 = sphi 0, %s30
      %s33 = sphi 0, %s31
      %s34 = sphi 0, %s32
      %s35 = sphi 0, %s33
      %s45 = sphi 0, %s47
      %s48 = sphi 0, %s45
      %s49 = sphi 0, %s48
      %s65 = sphi 0, %s49
      %s71 = sphi 0, %s73
      %s74 = sphi 0, %s71
      %s75 = sphi 0, %s74
      %s91 = sphi 0, %s75
      %s97 = sphi 0, %s99
      %s100 = sphi 0, %s97
      %s101 = sphi 0, %s100
      %s117 = sphi 0, %s101
      %s123 = sphi 0, %s125
      %s126 = sphi 0, %s123
      %s127 = sphi 0, %s126
      %s143 = sphi 0, %s127
      %s147 = sphi 0, %s147
      %s149 = sphi 0, %s147
      %s150 = sphi 0, %s149
      %s164 = sphi 0, %s150
      %s170 = sphi 0, %s172
      %s173 = sphi 0, %s170
      %s174 = sphi 0, %s173
      %s190 = sphi 0, %s174
    $region4: #{tpu_custom_call.1} parent=1 // loop_header_branch
      %26 = sbr.rel (%p24) target = $region8
    $region5: #{tpu_custom_call.1} parent=1 // loop_body
      %s28 = ssub.s32 %s23, 1
      %s29 = ssub.s32 %s23, 2
      %s36 = sadd.s32 1, %s31
      %p37 = scmp.ge.s32.totalorder %s36, 2
      %s38 = scalar_select %p37, 0, %s36
      %s39 = sadd.s32 1, %s30
      %s40 = scalar_select %p37, %s39, %s30
      %p41 = scmp.ge.s32.totalorder %s40, 2
      %s42 = scalar_select %p41, 0, %s40
      %s43 = ssub.s32 %s30, %s42
      %p44 = scmp.eq.s32.totalorder %s43, 0
      %s46 = sadd.s32 %s45, 1
      %s47 = scalar_select %p44, %s45, %s46
      %p50 = pneg %p44
      %p51 = scmp.eq.s32.totalorder %s23, 3
      %p52 = por %p50, %p51
      %p53 = scmp.ne.s32.totalorder %s45, %s48
      %p54 = scmp.eq.s32.totalorder %s23, 0
      %p55 = por %p53, %p54
      %p56 = scmp.ne.s32.totalorder %s45, %s48
      %p57 = scmp.eq.s32.totalorder %s28, 3
      %p58 = por %p56, %p57
      %p59 = scmp.ne.s32.totalorder %s48, %s49
      %p60 = scmp.eq.s32.totalorder %s28, 0
      %p61 = por %p59, %p60
      %p62 = scmp.ne.s32.totalorder %s48, %s49
      %p63 = scmp.eq.s32.totalorder %s29, 3
      %p64 = por %p62, %p63
      %p66 = scmp.ne.s32.totalorder %s49, %s65
      %p67 = scmp.eq.s32.totalorder %s29, 0
      %p68 = por %p66, %p67
      %s69 = ssub.s32 %s31, %s38
      %p70 = scmp.eq.s32.totalorder %s69, 0
      %s72 = sadd.s32 %s71, 1
      %s73 = scalar_select %p70, %s71, %s72
      %p76 = pneg %p70
      %p77 = scmp.eq.s32.totalorder %s23, 3
      %p78 = por %p76, %p77
      %p79 = scmp.ne.s32.totalorder %s71, %s74
      %p80 = scmp.eq.s32.totalorder %s23, 0
      %p81 = por %p79, %p80
      %p82 = scmp.ne.s32.totalorder %s71, %s74
      %p83 = scmp.eq.s32.totalorder %s28, 3
      %p84 = por %p82, %p83
      %p85 = scmp.ne.s32.totalorder %s74, %s75
      %p86 = scmp.eq.s32.totalorder %s28, 0
      %p87 = por %p85, %p86
      %p88 = scmp.ne.s32.totalorder %s74, %s75
      %p89 = scmp.eq.s32.totalorder %s29, 3
      %p90 = por %p88, %p89
      %p92 = scmp.ne.s32.totalorder %s75, %s91
      %p93 = scmp.eq.s32.totalorder %s29, 0
      %p94 = por %p92, %p93
      %s95 = ssub.s32 %s31, %s38
      %p96 = scmp.eq.s32.totalorder %s95, 0
      %s98 = sadd.s32 %s97, 1
      %s99 = scalar_select %p96, %s97, %s98
      %p102 = pneg %p96
      %p103 = scmp.eq.s32.totalorder %s23, 3
      %p104 = por %p102, %p103
      %p105 = scmp.ne.s32.totalorder %s97, %s100
      %p106 = scmp.eq.s32.totalorder %s23, 0
      %p107 = por %p105, %p106
      %p108 = scmp.ne.s32.totalorder %s97, %s100
      %p109 = scmp.eq.s32.totalorder %s28, 3
      %p110 = por %p108, %p109
      %p111 = scmp.ne.s32.totalorder %s100, %s101
      %p112 = scmp.eq.s32.totalorder %s28, 0
      %p113 = por %p111, %p112
      %p114 = scmp.ne.s32.totalorder %s100, %s101
      %p115 = scmp.eq.s32.totalorder %s29, 3
      %p116 = por %p114, %p115
      %p118 = scmp.ne.s32.totalorder %s101, %s117
      %p119 = scmp.eq.s32.totalorder %s29, 0
      %p120 = por %p118, %p119
      %s121 = ssub.s32 %s31, %s38
      %p122 = scmp.eq.s32.totalorder %s121, 0
      %s124 = sadd.s32 %s123, 1
      %s125 = scalar_select %p122, %s123, %s124
      %p128 = pneg %p122
      %p129 = scmp.eq.s32.totalorder %s23, 3
      %p130 = por %p128, %p129
      %p131 = scmp.ne.s32.totalorder %s123, %s126
      %p132 = scmp.eq.s32.totalorder %s23, 0
      %p133 = por %p131, %p132
      %p134 = scmp.ne.s32.totalorder %s123, %s126
      %p135 = scmp.eq.s32.totalorder %s28, 3
      %p136 = por %p134, %p135
      %p137 = scmp.ne.s32.totalorder %s126, %s127
      %p138 = scmp.eq.s32.totalorder %s28, 0
      %p139 = por %p137, %p138
      %p140 = scmp.ne.s32.totalorder %s126, %s127
      %p141 = scmp.eq.s32.totalorder %s29, 3
      %p142 = por %p140, %p141
      %p144 = scmp.ne.s32.totalorder %s127, %s143
      %p145 = scmp.eq.s32.totalorder %s29, 0
      %p146 = por %p144, %p145
      %s148 = sadd.s32 %s147, 1
      %p151 = scmp.eq.s32.totalorder %s23, 3
      %p152 = scmp.ne.s32.totalorder %s147, %s149
      %p153 = scmp.eq.s32.totalorder %s23, 0
      %p154 = por %p152, %p153
      %p155 = scmp.ne.s32.totalorder %s147, %s149
      %p156 = scmp.eq.s32.totalorder %s28, 3
      %p157 = por %p155, %p156
      %p158 = scmp.ne.s32.totalorder %s149, %s150
      %p159 = scmp.eq.s32.totalorder %s28, 0
      %p160 = por %p158, %p159
      %p161 = scmp.ne.s32.totalorder %s149, %s150
      %p162 = scmp.eq.s32.totalorder %s29, 3
      %p163 = por %p161, %p162
      %p165 = scmp.ne.s32.totalorder %s150, %s164
      %p166 = scmp.eq.s32.totalorder %s29, 0
      %p167 = por %p165, %p166
      %s168 = ssub.s32 %s30, %s42
      %p169 = scmp.eq.s32.totalorder %s168, 0
      %s171 = sadd.s32 %s170, 1
      %s172 = scalar_select %p169, %s170, %s171
      %p175 = pneg %p169
      %p176 = scmp.eq.s32.totalorder %s23, 3
      %p177 = por %p175, %p176
      %p178 = scmp.ne.s32.totalorder %s170, %s173
      %p179 = scmp.eq.s32.totalorder %s23, 0
      %p180 = por %p178, %p179
      %p181 = scmp.ne.s32.totalorder %s170, %s173
      %p182 = scmp.eq.s32.totalorder %s28, 3
      %p183 = por %p181, %p182
      %p184 = scmp.ne.s32.totalorder %s173, %s174
      %p185 = scmp.eq.s32.totalorder %s28, 0
      %p186 = por %p184, %p185
      %p187 = scmp.ne.s32.totalorder %s173, %s174
      %p188 = scmp.eq.s32.totalorder %s29, 3
      %p189 = por %p187, %p188
      %p191 = scmp.ne.s32.totalorder %s174, %s190
      %p192 = scmp.eq.s32.totalorder %s29, 0
      %p193 = por %p191, %p192
      %p194 = scmp.le.s32.totalorder 1, %s23
      %p195 = scmp.lt.s32.totalorder %s23, 5
      %p196 = pnand %p194, %p195
      %p197 = pneg %p196
      // Predicated region
      $region9: #{tpu_custom_call.1} parent=5 // pred_check
        _
      $region10: #{tpu_custom_call.1} parent=5 // pred_check_branch
        %199 = sbr.rel (%p196) target = $region12
      $region11: #{tpu_custom_call.1} parent=5 // pred_region
        %s200 = ssub.s32 %s23, 1
        // Predicated region
        $region13: #{tpu_custom_call.1} parent=11 // pred_check
          %p201 = pneg %p160
        $region14: #{tpu_custom_call.1} parent=11 // pred_check_branch
          %203 = sbr.rel (%p201) target = $region16
        $region15: #{tpu_custom_call.1} parent=11 // pred_region
          _
        $region16: #{tpu_custom_call.1} parent=11 // pred_fallthru
          _
      $region12: #{tpu_custom_call.1} parent=5 // pred_fallthru
        _
      %p204 = scmp.lt.s32.totalorder %s23, 4
      // Predicated region
      $region17: #{tpu_custom_call.1} parent=5 // pred_check
        %p205 = pneg %p204
      $region18: #{tpu_custom_call.1} parent=5 // pred_check_branch
        %207 = sbr.rel (%p205) target = $region20
      $region19: #{tpu_custom_call.1} parent=5 // pred_region
        // Predicated region
        $region21: #{tpu_custom_call.1} parent=19 // pred_check
          %p208 = pneg %p55
        $region22: #{tpu_custom_call.1} parent=19 // pred_check_branch
          %210 = sbr.rel (%p208) target = $region24
        $region23: #{tpu_custom_call.1} parent=19 // pred_region
          %s211 = sand.u32 %s45, 1
          %s212 = scalar_lea.sflag [#allocation4], %s211
          %s213 = sand.u32 %s45, 1
          %s214 = smul.addr %s213, 64
          %s215 = scalar_lea.vmem [#allocation3], %s214
          %s216 = smul.u32 16, %s30
          %s218 = ssub.s32 1024, 1024
          %219 = vsyncadd %s212, %s218
          %s220 = smul.addr %s216, 64
          %s221 = scalar_lea.hbm %s0, %s220
          %s222 = sshll.u32 %s215, 4
          %s223 = int_to_ptr.vmem [resolvable:$true] %s222
          %228 = dma.hbm_to_vmem [thread:$0]  %s221, 1024, %s223, %s212, 64, 64, 4
        $region24: #{tpu_custom_call.1} parent=19 // pred_fallthru
          _
        // Predicated region
        $region25: #{tpu_custom_call.1} parent=19 // pred_check
          %p229 = pneg %p81
        $region26: #{tpu_custom_call.1} parent=19 // pred_check_branch
          %231 = sbr.rel (%p229) target = $region28
        $region27: #{tpu_custom_call.1} parent=19 // pred_region
          %s232 = sand.u32 %s23, 1
          %s233 = scalar_lea.sflag [#allocation7], %s232
          %s234 = sand.u32 %s71, 1
          %s235 = smul.addr %s234, 128
          %s236 = scalar_lea.vmem [#allocation6], %s235
          %s237 = smul.u32 2, %s31
          %s239 = ssub.s32 2048, 2048
          %240 = vsyncadd %s233, %s239
          %s241 = smul.addr %s237, 64
          %s242 = scalar_lea.hbm %s1, %s241
          %s243 = sshll.u32 %s236, 4
          %s244 = int_to_ptr.vmem [resolvable:$true] %s243
          %249 = dma.hbm_to_vmem [thread:$0]  %s242, 2048, %s244, %s233, 256, 128, 8
        $region28: #{tpu_custom_call.1} parent=19 // pred_fallthru
          _
        // Predicated region
        $region29: #{tpu_custom_call.1} parent=19 // pred_check
          %p250 = pneg %p107
        $region30: #{tpu_custom_call.1} parent=19 // pred_check_branch
          %252 = sbr.rel (%p250) target = $region32
        $region31: #{tpu_custom_call.1} parent=19 // pred_region
          %s253 = sand.u32 %s23, 1
          %s254 = scalar_lea.sflag [#allocation7], %s253
          %s255 = sand.u32 %s97, 1
          %s256 = smul.addr %s255, 2
          %s257 = scalar_lea.vmem [#allocation8], %s256
          %s258 = smul.u32 2, %s31
          %s260 = ssub.s32 32, 32
          %261 = vsyncadd %s254, %s260
          %s262 = smul.addr %s258, 16
          %s263 = scalar_lea.hbm %s2, %s262
          %s265 = sshll.u32 %s257, 4
          %s266 = int_to_ptr.vmem [resolvable:$true] %s265
          %268 = dma.hbm_to_vmem [thread:$0]  %s263, 32, %s266, %s254
        $region32: #{tpu_custom_call.1} parent=19 // pred_fallthru
          _
        // Predicated region
        $region33: #{tpu_custom_call.1} parent=19 // pred_check
          %p269 = pneg %p133
        $region34: #{tpu_custom_call.1} parent=19 // pred_check_branch
          %271 = sbr.rel (%p269) target = $region36
        $region35: #{tpu_custom_call.1} parent=19 // pred_region
          %s272 = sand.u32 %s123, 1
          %s273 = scalar_lea.sflag [#allocation10], %s272
          %s274 = sand.u32 %s123, 1
          %s275 = smul.addr %s274, 128
          %s276 = scalar_lea.vmem [#allocation9], %s275
          %s277 = smul.u32 32, %s31
          %s279 = ssub.s32 2048, 2048
          %280 = vsyncadd %s273, %s279
          %s281 = smul.addr %s277, 64
          %s282 = scalar_lea.hbm %s3, %s281
          %s283 = sshll.u32 %s276, 4
          %s284 = int_to_ptr.vmem [resolvable:$true] %s283
          %289 = dma.hbm_to_vmem [thread:$0]  %s282, 2048, %s284, %s273, 64, 64, 4
        $region36: #{tpu_custom_call.1} parent=19 // pred_fallthru
          _
      $region20: #{tpu_custom_call.1} parent=5 // pred_fallthru
        _
      %p290 = scmp.le.s32.totalorder 1, %s23
      %p291 = scmp.lt.s32.totalorder %s23, 5
      %p292 = pnand %p290, %p291
      %p293 = pneg %p292
      // Predicated region
      $region37: #{tpu_custom_call.1} parent=5 // pred_check
        _
      $region38: #{tpu_custom_call.1} parent=5 // pred_check_branch
        %295 = sbr.rel (%p292) target = $region40
      $region39: #{tpu_custom_call.1} parent=5 // pred_region
        %s296 = ssub.s32 %s23, 1
        %s297 = sand.u32 %s48, 1
        %s298 = scalar_lea.sflag [#allocation4], %s297
        %s299 = sand.u32 %s48, 1
        %s300 = smul.addr %s299, 64
        %s301 = scalar_lea.vmem [#allocation3], %s300
        // Predicated region
        $region41: #{tpu_custom_call.1} parent=39 // pred_check
          %p302 = pneg %p61
        $region42: #{tpu_custom_call.1} parent=39 // pred_check_branch
          %304 = sbr.rel (%p302) target = $region44
        $region43: #{tpu_custom_call.1} parent=39 // pred_region
          %305 = dma.done %s298, 1024
        $region44: #{tpu_custom_call.1} parent=39 // pred_fallthru
          _
        %s306 = sand.u32 %s28, 1
        %s307 = scalar_lea.sflag [#allocation7], %s306
        %s308 = sand.u32 %s74, 1
        %s309 = smul.addr %s308, 128
        %s310 = scalar_lea.vmem [#allocation6], %s309
        // Predicated region
        $region45: #{tpu_custom_call.1} parent=39 // pred_check
          %p311 = pneg %p87
        $region46: #{tpu_custom_call.1} parent=39 // pred_check_branch
          %313 = sbr.rel (%p311) target = $region48
        $region47: #{tpu_custom_call.1} parent=39 // pred_region
          %314 = dma.done %s307, 2048
        $region48: #{tpu_custom_call.1} parent=39 // pred_fallthru
          _
        %s315 = sand.u32 %s28, 1
        %s316 = scalar_lea.sflag [#allocation7], %s315
        %s317 = sand.u32 %s100, 1
        %s318 = smul.addr %s317, 2
        %s319 = scalar_lea.vmem [#allocation8], %s318
        // Predicated region
        $region49: #{tpu_custom_call.1} parent=39 // pred_check
          %p320 = pneg %p113
        $region50: #{tpu_custom_call.1} parent=39 // pred_check_branch
          %322 = sbr.rel (%p320) target = $region52
        $region51: #{tpu_custom_call.1} parent=39 // pred_region
          %323 = dma.done %s316, 32
        $region52: #{tpu_custom_call.1} parent=39 // pred_fallthru
          _
        %s324 = sand.u32 %s126, 1
        %s325 = scalar_lea.sflag [#allocation10], %s324
        %s326 = sand.u32 %s126, 1
        %s327 = smul.addr %s326, 128
        %s328 = scalar_lea.vmem [#allocation9], %s327
        // Predicated region
        $region53: #{tpu_custom_call.1} parent=39 // pred_check
          %p329 = pneg %p139
        $region54: #{tpu_custom_call.1} parent=39 // pred_check_branch
          %331 = sbr.rel (%p329) target = $region56
        $region55: #{tpu_custom_call.1} parent=39 // pred_region
          %332 = dma.done %s325, 2048
        $region56: #{tpu_custom_call.1} parent=39 // pred_fallthru
          _
        %s333 = sand.u32 %s48, 1
        %s334 = scalar_lea.sflag [#allocation4], %s333
        %s335 = sand.u32 %s48, 1
        %s336 = smul.addr %s335, 64
        %s337 = scalar_lea.vmem [#allocation3], %s336
        %p338 = pneg %p61
        %p339 = pneg %p58
        %s340 = sand.u32 %s28, 1
        %s341 = scalar_lea.sflag [#allocation7], %s340
        %s342 = sand.u32 %s74, 1
        %s343 = smul.addr %s342, 128
        %s344 = scalar_lea.vmem [#allocation6], %s343
        %p345 = pneg %p87
        %p346 = pneg %p84
        %s347 = sand.u32 %s28, 1
        %s348 = scalar_lea.sflag [#allocation7], %s347
        %s349 = sand.u32 %s100, 1
        %s350 = smul.addr %s349, 2
        %s351 = scalar_lea.vmem [#allocation8], %s350
        %p352 = pneg %p113
        %p353 = pneg %p110
        %s354 = sand.u32 %s126, 1
        %s355 = scalar_lea.sflag [#allocation10], %s354
        %s356 = sand.u32 %s126, 1
        %s357 = smul.addr %s356, 128
        %s358 = scalar_lea.vmem [#allocation9], %s357
        %p359 = pneg %p139
        %p360 = pneg %p136
        %p361 = pneg %p160
        %p362 = pneg %p157
        %p363 = pneg %p186
        %p364 = pneg %p183
        %s365 = sand.u32 %s173, 1
        %s366 = scalar_lea.sflag [#allocation5], %s365
        %s367 = sand.u32 %s173, 1
        %s368 = smul.addr %s367, 128
        %s369 = scalar_lea.vmem [#allocation11], %s368
        %s370 = smul.u32 16, %s32
        %s371 = smul.u32 2, %s33
        %s372 = smul.u32 2, %s33
        %s373 = smul.u32 32, %s33
        %s374 = smul.u32 16, %s32
        %p376 = scmp.eq.s32.totalorder %s33, 0
        // Predicated region
        $region57: #{tpu_custom_call.1} parent=39 // pred_check
          %p377 = pneg %p376
        $region58: #{tpu_custom_call.1} parent=39 // pred_check_branch
          %379 = sbr.rel (%p377) target = $region60
        $region59: #{tpu_custom_call.1} parent=39 // pred_region
          %380 = vst [vmem:[#allocation2] sm:$0xff] 0.0
          %381 = vst [vmem:[#allocation2 + $0x8] sm:$0xff] 0.0
          %382 = vst [vmem:[#allocation2 + $0x10] sm:$0xff] 0.0
          %383 = vst [vmem:[#allocation2 + $0x18] sm:$0xff] 0.0
          %384 = vst [vmem:[#allocation2 + $0x20] sm:$0xff] 0.0
          %385 = vst [vmem:[#allocation2 + $0x28] sm:$0xff] 0.0
          %386 = vst [vmem:[#allocation2 + $0x30] sm:$0xff] 0.0
          %387 = vst [vmem:[#allocation2 + $0x38] sm:$0xff] 0.0
          %388 = vst [vmem:[#allocation2 + $0x40] sm:$0xff] 0.0
          %389 = vst [vmem:[#allocation2 + $0x48] sm:$0xff] 0.0
          %390 = vst [vmem:[#allocation2 + $0x50] sm:$0xff] 0.0
          %391 = vst [vmem:[#allocation2 + $0x58] sm:$0xff] 0.0
          %392 = vst [vmem:[#allocation2 + $0x60] sm:$0xff] 0.0
          %393 = vst [vmem:[#allocation2 + $0x68] sm:$0xff] 0.0
          %394 = vst [vmem:[#allocation2 + $0x70] sm:$0xff] 0.0
          %395 = vst [vmem:[#allocation2 + $0x78] sm:$0xff] 0.0
        $region60: #{tpu_custom_call.1} parent=39 // pred_fallthru
          _
        %v396 = vld [vmem:[%s301] sm:$0xf]
        %v397 = vld [vmem:[%s301 + $0x4] sm:$0xf]
        %v398 = vld [vmem:[%s301 + $0x8] sm:$0xf]
        %v399 = vld [vmem:[%s301 + $0xc] sm:$0xf]
        %v400 = vld [vmem:[%s301 + $0x10] sm:$0xf]
        %v401 = vld [vmem:[%s301 + $0x14] sm:$0xf]
        %v402 = vld [vmem:[%s301 + $0x18] sm:$0xf]
        %v403 = vld [vmem:[%s301 + $0x1c] sm:$0xf]
        %v404 = vld [vmem:[%s301 + $0x20] sm:$0xf]
        %v405 = vld [vmem:[%s301 + $0x24] sm:$0xf]
        %v406 = vld [vmem:[%s301 + $0x28] sm:$0xf]
        %v407 = vld [vmem:[%s301 + $0x2c] sm:$0xf]
        %v408 = vld [vmem:[%s301 + $0x30] sm:$0xf]
        %v409 = vld [vmem:[%s301 + $0x34] sm:$0xf]
        %v410 = vld [vmem:[%s301 + $0x38] sm:$0xf]
        %v411 = vld [vmem:[%s301 + $0x3c] sm:$0xf]
        %v412 = vld [vmem:[%s310] sm:$0xff]
        %v413 = vld [vmem:[%s310 + $0x8] sm:$0xff]
        %v414 = vld [vmem:[%s310 + $0x10] sm:$0xff]
        %v415 = vld [vmem:[%s310 + $0x18] sm:$0xff]
        %v416 = vld [vmem:[%s310 + $0x20] sm:$0xff]
        %v417 = vld [vmem:[%s310 + $0x28] sm:$0xff]
        %v418 = vld [vmem:[%s310 + $0x30] sm:$0xff]
        %v419 = vld [vmem:[%s310 + $0x38] sm:$0xff]
        %v420 = vld [vmem:[%s310 + $0x40] sm:$0xff]
        %v421 = vld [vmem:[%s310 + $0x48] sm:$0xff]
        %v422 = vld [vmem:[%s310 + $0x50] sm:$0xff]
        %v423 = vld [vmem:[%s310 + $0x58] sm:$0xff]
        %v424 = vld [vmem:[%s310 + $0x60] sm:$0xff]
        %v425 = vld [vmem:[%s310 + $0x68] sm:$0xff]
        %v426 = vld [vmem:[%s310 + $0x70] sm:$0xff]
        %v427 = vld [vmem:[%s310 + $0x78] sm:$0xff]
        %v428 = vld [vmem:[%s319] sm:$0x3]
        %v430 = vlaneseq
        %v431 = vshrl.u32 %v430, 7
        %v432 = vsub.s32 0, %v431
        %v433 = vrot.slane %v428, %v432
        %v434 = vlaneseq
        %v435 = vshrl.u32 %v434, 7
        %v436 = vsub.s32 1, %v435
        %v437 = vrot.slane %v428, %v436
        %v456 = vunpack.c.l.b16 %v396
        %v457 = vunpack.c.l.b16 %v397
        %v458 = vunpack.c.l.b16 %v398
        %v459 = vunpack.c.l.b16 %v399
        %v460 = vunpack.c.l.b16 %v400
        %v461 = vunpack.c.l.b16 %v401
        %v462 = vunpack.c.l.b16 %v402
        %v463 = vunpack.c.l.b16 %v403
        %v464 = vunpack.c.l.b16 %v404
        %v465 = vunpack.c.l.b16 %v405
        %v466 = vunpack.c.l.b16 %v406
        %v467 = vunpack.c.l.b16 %v407
        %v468 = vunpack.c.l.b16 %v408
        %v469 = vunpack.c.l.b16 %v409
        %v470 = vunpack.c.l.b16 %v410
        %v471 = vunpack.c.l.b16 %v411
        %v472 = vpack.c.b16 %v457, %v456
        %v473 = vpack.c.b16 %v459, %v458
        %v474 = vpack.c.b16 %v461, %v460
        %v475 = vpack.c.b16 %v463, %v462
        %v476 = vpack.c.b16 %v465, %v464
        %v477 = vpack.c.b16 %v467, %v466
        %v478 = vpack.c.b16 %v469, %v468
        %v479 = vpack.c.b16 %v471, %v470
        %v504 = vunpack.c.l.b16 %v412
        %v505 = vunpack.c.h.b16 %v412
        %v506 = vunpack.c.l.b16 %v413
        %v507 = vunpack.c.h.b16 %v413
        %v508 = vunpack.c.l.b16 %v414
        %v509 = vunpack.c.h.b16 %v414
        %v510 = vunpack.c.l.b16 %v415
        %v511 = vunpack.c.h.b16 %v415
        %v512 = vunpack.c.l.b16 %v416
        %v513 = vunpack.c.h.b16 %v416
        %v514 = vunpack.c.l.b16 %v417
        %v515 = vunpack.c.h.b16 %v417
        %v516 = vunpack.c.l.b16 %v418
        %v517 = vunpack.c.h.b16 %v418
        %v518 = vunpack.c.l.b16 %v419
        %v519 = vunpack.c.h.b16 %v419
        %v520 = vunpack.c.l.b16 %v420
        %v521 = vunpack.c.h.b16 %v420
        %v522 = vunpack.c.l.b16 %v421
        %v523 = vunpack.c.h.b16 %v421
        %v524 = vunpack.c.l.b16 %v422
        %v525 = vunpack.c.h.b16 %v422
        %v526 = vunpack.c.l.b16 %v423
        %v527 = vunpack.c.h.b16 %v423
        %v528 = vunpack.c.l.b16 %v424
        %v529 = vunpack.c.h.b16 %v424
        %v530 = vunpack.c.l.b16 %v425
        %v531 = vunpack.c.h.b16 %v425
        %v532 = vunpack.c.l.b16 %v426
        %v533 = vunpack.c.h.b16 %v426
        %v534 = vunpack.c.l.b16 %v427
        %v535 = vunpack.c.h.b16 %v427
        %v536 = vpack.c.b16 %v506, %v504
        %v537 = vpack.c.b16 %v507, %v505
        %v538 = vpack.c.b16 %v510, %v508
        %v539 = vpack.c.b16 %v511, %v509
        %v540 = vpack.c.b16 %v514, %v512
        %v541 = vpack.c.b16 %v515, %v513
        %v542 = vpack.c.b16 %v518, %v516
        %v543 = vpack.c.b16 %v519, %v517
        %v544 = vpack.c.b16 %v522, %v520
        %v545 = vpack.c.b16 %v523, %v521
        %v546 = vpack.c.b16 %v526, %v524
        %v547 = vpack.c.b16 %v527, %v525
        %v548 = vpack.c.b16 %v530, %v528
        %v549 = vpack.c.b16 %v531, %v529
        %v550 = vpack.c.b16 %v534, %v532
        %v551 = vpack.c.b16 %v535, %v533
        %568 = vmatprep.subr.bf16.mxu0 %v551
        %569 = vmatpush1.bf16.msra.mxu0 %v550
        %570 = vmatprep.subr.bf16.mxu0 %v549
        %571 = vmatpush1.bf16.msra.mxu0 %v548
        %572 = vmatprep.subr.bf16.mxu0 %v547
        %573 = vmatpush1.bf16.msra.mxu0 %v546
        %574 = vmatprep.subr.bf16.mxu0 %v545
        %575 = vmatpush1.bf16.msra.mxu0 %v544
        %576 = vmatprep.subr.bf16.mxu0 %v543
        %577 = vmatpush1.bf16.msra.mxu0 %v542
        %578 = vmatprep.subr.bf16.mxu0 %v541
        %579 = vmatpush1.bf16.msra.mxu0 %v540
        %580 = vmatprep.subr.bf16.mxu0 %v539
        %581 = vmatpush1.bf16.msra.mxu0 %v538
        %582 = vmatprep.subr.bf16.mxu0 %v537
        %583 = vmatpush1.bf16.msra.mxu0 %v536
        %584 = vmatprep.subr.bf16.mxu0 0
        %585 = vmatpush2.bf16.msra.mxu0 0
        %586 = vmatprep.subr.bf16.mxu0 0
        %587 = vmatpush2.bf16.msra.mxu0 0
        %588 = vmatprep.subr.bf16.mxu0 0
        %589 = vmatpush2.bf16.msra.mxu0 0
        %590 = vmatprep.subr.bf16.mxu0 0
        %591 = vmatpush2.bf16.msra.mxu0 0
        %592 = vmatprep.subr.bf16.mxu0 0
        %593 = vmatpush2.bf16.msra.mxu0 0
        %594 = vmatprep.subr.bf16.mxu0 0
        %595 = vmatpush2.bf16.msra.mxu0 0
        %596 = vmatprep.subr.bf16.mxu0 0
        %597 = vmatpush2.bf16.msra.mxu0 0
        %598 = vmatprep.subr.bf16.mxu0 0
        %599 = vmatpush2.bf16.msra.mxu0 0
        %600 = vmatprep.mubr.bf16.mxu0 0
        %601 = vmatmul.mubr.bf16.gmra.mxu0 %v472
        %v602 = vpop.f32.mrf.mxu0
        %v603 = vadd.f32 %v433, %v602
        %v604 = vpop.f32.mrf.mxu0
        %v605 = vadd.f32 %v437, %v604
        %v606 = vpop.f32.mrf.mxu0
        %v607 = vadd.f32 %v433, %v606
        %v608 = vpop.f32.mrf.mxu0
        %v609 = vadd.f32 %v437, %v608
        %610 = vmatprep.mubr.bf16.mxu0 0
        %611 = vmatmul.mubr.bf16.gmra.mxu0 %v473
        %v612 = vpop.f32.mrf.mxu0
        %v613 = vadd.f32 %v433, %v612
        %v614 = vpop.f32.mrf.mxu0
        %v615 = vadd.f32 %v437, %v614
        %v616 = vpop.f32.mrf.mxu0
        %v617 = vadd.f32 %v433, %v616
        %v618 = vpop.f32.mrf.mxu0
        %v619 = vadd.f32 %v437, %v618
        %620 = vmatprep.mubr.bf16.mxu0 0
        %621 = vmatmul.mubr.bf16.gmra.mxu0 %v474
        %v622 = vpop.f32.mrf.mxu0
        %v623 = vadd.f32 %v433, %v622
        %v624 = vpop.f32.mrf.mxu0
        %v625 = vadd.f32 %v437, %v624
        %v626 = vpop.f32.mrf.mxu0
        %v627 = vadd.f32 %v433, %v626
        %v628 = vpop.f32.mrf.mxu0
        %v629 = vadd.f32 %v437, %v628
        %630 = vmatprep.mubr.bf16.mxu0 0
        %631 = vmatmul.mubr.bf16.gmra.mxu0 %v475
        %v632 = vpop.f32.mrf.mxu0
        %v633 = vadd.f32 %v433, %v632
        %v634 = vpop.f32.mrf.mxu0
        %v635 = vadd.f32 %v437, %v634
        %v636 = vpop.f32.mrf.mxu0
        %v637 = vadd.f32 %v433, %v636
        %v638 = vpop.f32.mrf.mxu0
        %v639 = vadd.f32 %v437, %v638
        %640 = vmatprep.mubr.bf16.mxu0 0
        %641 = vmatmul.mubr.bf16.gmra.mxu0 %v476
        %v642 = vpop.f32.mrf.mxu0
        %v643 = vadd.f32 %v433, %v642
        %v644 = vpop.f32.mrf.mxu0
        %v645 = vadd.f32 %v437, %v644
        %v646 = vpop.f32.mrf.mxu0
        %v647 = vadd.f32 %v433, %v646
        %v648 = vpop.f32.mrf.mxu0
        %v649 = vadd.f32 %v437, %v648
        %650 = vmatprep.mubr.bf16.mxu0 0
        %651 = vmatmul.mubr.bf16.gmra.mxu0 %v477
        %v652 = vpop.f32.mrf.mxu0
        %v653 = vadd.f32 %v433, %v652
        %v654 = vpop.f32.mrf.mxu0
        %v655 = vadd.f32 %v437, %v654
        %v656 = vpop.f32.mrf.mxu0
        %v657 = vadd.f32 %v433, %v656
        %v658 = vpop.f32.mrf.mxu0
        %v659 = vadd.f32 %v437, %v658
        %660 = vmatprep.mubr.bf16.mxu0 0
        %661 = vmatmul.mubr.bf16.gmra.mxu0 %v478
        %v662 = vpop.f32.mrf.mxu0
        %v663 = vadd.f32 %v433, %v662
        %v664 = vpop.f32.mrf.mxu0
        %v665 = vadd.f32 %v437, %v664
        %v666 = vpop.f32.mrf.mxu0
        %v667 = vadd.f32 %v433, %v666
        %v668 = vpop.f32.mrf.mxu0
        %v669 = vadd.f32 %v437, %v668
        %670 = vmatprep.mubr.bf16.mxu0 0
        %671 = vmatmul.mubr.bf16.gmra.mxu0 %v479
        %v672 = vpop.f32.mrf.mxu0
        %v673 = vadd.f32 %v433, %v672
        %v674 = vpop.f32.mrf.mxu0
        %v675 = vadd.f32 %v437, %v674
        %v676 = vpop.f32.mrf.mxu0
        %v677 = vadd.f32 %v433, %v676
        %v678 = vpop.f32.mrf.mxu0
        %v679 = vadd.f32 %v437, %v678
        %680 = vdwg.mxu0
        %v681 = vmax.f32 %v603, 0.0
        %v682 = vmax.f32 %v605, 0.0
        %v683 = vmax.f32 %v607, 0.0
        %v684 = vmax.f32 %v609, 0.0
        %v685 = vmax.f32 %v613, 0.0
        %v686 = vmax.f32 %v615, 0.0
        %v687 = vmax.f32 %v617, 0.0
        %v688 = vmax.f32 %v619, 0.0
        %v689 = vmax.f32 %v623, 0.0
        %v690 = vmax.f32 %v625, 0.0
        %v691 = vmax.f32 %v627, 0.0
        %v692 = vmax.f32 %v629, 0.0
        %v693 = vmax.f32 %v633, 0.0
        %v694 = vmax.f32 %v635, 0.0
        %v695 = vmax.f32 %v637, 0.0
        %v696 = vmax.f32 %v639, 0.0
        %v697 = vmax.f32 %v643, 0.0
        %v698 = vmax.f32 %v645, 0.0
        %v699 = vmax.f32 %v647, 0.0
        %v700 = vmax.f32 %v649, 0.0
        %v701 = vmax.f32 %v653, 0.0
        %v702 = vmax.f32 %v655, 0.0
        %v703 = vmax.f32 %v657, 0.0
        %v704 = vmax.f32 %v659, 0.0
        %v705 = vmax.f32 %v663, 0.0
        %v706 = vmax.f32 %v665, 0.0
        %v707 = vmax.f32 %v667, 0.0
        %v708 = vmax.f32 %v669, 0.0
        %v709 = vmax.f32 %v673, 0.0
        %v710 = vmax.f32 %v675, 0.0
        %v711 = vmax.f32 %v677, 0.0
        %v712 = vmax.f32 %v679, 0.0
        %v713 = vld [vmem:[#allocation2] sm:$0xff]
        %v714 = vld [vmem:[#allocation2 + $0x8] sm:$0xff]
        %v715 = vld [vmem:[#allocation2 + $0x10] sm:$0xff]
        %v716 = vld [vmem:[#allocation2 + $0x18] sm:$0xff]
        %v717 = vld [vmem:[#allocation2 + $0x20] sm:$0xff]
        %v718 = vld [vmem:[#allocation2 + $0x28] sm:$0xff]
        %v719 = vld [vmem:[#allocation2 + $0x30] sm:$0xff]
        %v720 = vld [vmem:[#allocation2 + $0x38] sm:$0xff]
        %v721 = vld [vmem:[#allocation2 + $0x40] sm:$0xff]
        %v722 = vld [vmem:[#allocation2 + $0x48] sm:$0xff]
        %v723 = vld [vmem:[#allocation2 + $0x50] sm:$0xff]
        %v724 = vld [vmem:[#allocation2 + $0x58] sm:$0xff]
        %v725 = vld [vmem:[#allocation2 + $0x60] sm:$0xff]
        %v726 = vld [vmem:[#allocation2 + $0x68] sm:$0xff]
        %v727 = vld [vmem:[#allocation2 + $0x70] sm:$0xff]
        %v728 = vld [vmem:[#allocation2 + $0x78] sm:$0xff]
        %v729 = vpack.c.bf16 %v683, %v681
        %v730 = vpack.c.bf16 %v684, %v682
        %v731 = vpack.c.bf16 %v687, %v685
        %v732 = vpack.c.bf16 %v688, %v686
        %v733 = vpack.c.bf16 %v691, %v689
        %v734 = vpack.c.bf16 %v692, %v690
        %v735 = vpack.c.bf16 %v695, %v693
        %v736 = vpack.c.bf16 %v696, %v694
        %v737 = vpack.c.bf16 %v699, %v697
        %v738 = vpack.c.bf16 %v700, %v698
        %v739 = vpack.c.bf16 %v703, %v701
        %v740 = vpack.c.bf16 %v704, %v702
        %v741 = vpack.c.bf16 %v707, %v705
        %v742 = vpack.c.bf16 %v708, %v706
        %v743 = vpack.c.bf16 %v711, %v709
        %v744 = vpack.c.bf16 %v712, %v710
        %v745 = vld [vmem:[%s328] sm:$0xf]
        %v746 = vld [vmem:[%s328 + $0x4] sm:$0xf]
        %v747 = vld [vmem:[%s328 + $0x8] sm:$0xf]
        %v748 = vld [vmem:[%s328 + $0xc] sm:$0xf]
        %v749 = vld [vmem:[%s328 + $0x10] sm:$0xf]
        %v750 = vld [vmem:[%s328 + $0x14] sm:$0xf]
        %v751 = vld [vmem:[%s328 + $0x18] sm:$0xf]
        %v752 = vld [vmem:[%s328 + $0x1c] sm:$0xf]
        %v753 = vld [vmem:[%s328 + $0x20] sm:$0xf]
        %v754 = vld [vmem:[%s328 + $0x24] sm:$0xf]
        %v755 = vld [vmem:[%s328 + $0x28] sm:$0xf]
        %v756 = vld [vmem:[%s328 + $0x2c] sm:$0xf]
        %v757 = vld [vmem:[%s328 + $0x30] sm:$0xf]
        %v758 = vld [vmem:[%s328 + $0x34] sm:$0xf]
        %v759 = vld [vmem:[%s328 + $0x38] sm:$0xf]
        %v760 = vld [vmem:[%s328 + $0x3c] sm:$0xf]
        %v761 = vld [vmem:[%s328 + $0x40] sm:$0xf]
        %v762 = vld [vmem:[%s328 + $0x44] sm:$0xf]
        %v763 = vld [vmem:[%s328 + $0x48] sm:$0xf]
        %v764 = vld [vmem:[%s328 + $0x4c] sm:$0xf]
        %v765 = vld [vmem:[%s328 + $0x50] sm:$0xf]
        %v766 = vld [vmem:[%s328 + $0x54] sm:$0xf]
        %v767 = vld [vmem:[%s328 + $0x58] sm:$0xf]
        %v768 = vld [vmem:[%s328 + $0x5c] sm:$0xf]
        %v769 = vld [vmem:[%s328 + $0x60] sm:$0xf]
        %v770 = vld [vmem:[%s328 + $0x64] sm:$0xf]
        %v771 = vld [vmem:[%s328 + $0x68] sm:$0xf]
        %v772 = vld [vmem:[%s328 + $0x6c] sm:$0xf]
        %v773 = vld [vmem:[%s328 + $0x70] sm:$0xf]
        %v774 = vld [vmem:[%s328 + $0x74] sm:$0xf]
        %v775 = vld [vmem:[%s328 + $0x78] sm:$0xf]
        %v776 = vld [vmem:[%s328 + $0x7c] sm:$0xf]
        %v809 = vunpack.c.l.b16 %v745
        %v810 = vunpack.c.l.b16 %v746
        %v811 = vunpack.c.l.b16 %v747
        %v812 = vunpack.c.l.b16 %v748
        %v813 = vunpack.c.l.b16 %v749
        %v814 = vunpack.c.l.b16 %v750
        %v815 = vunpack.c.l.b16 %v751
        %v816 = vunpack.c.l.b16 %v752
        %v817 = vunpack.c.l.b16 %v753
        %v818 = vunpack.c.l.b16 %v754
        %v819 = vunpack.c.l.b16 %v755
        %v820 = vunpack.c.l.b16 %v756
        %v821 = vunpack.c.l.b16 %v757
        %v822 = vunpack.c.l.b16 %v758
        %v823 = vunpack.c.l.b16 %v759
        %v824 = vunpack.c.l.b16 %v760
        %v825 = vunpack.c.l.b16 %v761
        %v826 = vunpack.c.l.b16 %v762
        %v827 = vunpack.c.l.b16 %v763
        %v828 = vunpack.c.l.b16 %v764
        %v829 = vunpack.c.l.b16 %v765
        %v830 = vunpack.c.l.b16 %v766
        %v831 = vunpack.c.l.b16 %v767
        %v832 = vunpack.c.l.b16 %v768
        %v833 = vunpack.c.l.b16 %v769
        %v834 = vunpack.c.l.b16 %v770
        %v835 = vunpack.c.l.b16 %v771
        %v836 = vunpack.c.l.b16 %v772
        %v837 = vunpack.c.l.b16 %v773
        %v838 = vunpack.c.l.b16 %v774
        %v839 = vunpack.c.l.b16 %v775
        %v840 = vunpack.c.l.b16 %v776
        %v841 = vpack.c.b16 %v810, %v809
        %v842 = vpack.c.b16 %v812, %v811
        %v843 = vpack.c.b16 %v814, %v813
        %v844 = vpack.c.b16 %v816, %v815
        %v845 = vpack.c.b16 %v818, %v817
        %v846 = vpack.c.b16 %v820, %v819
        %v847 = vpack.c.b16 %v822, %v821
        %v848 = vpack.c.b16 %v824, %v823
        %v849 = vpack.c.b16 %v826, %v825
        %v850 = vpack.c.b16 %v828, %v827
        %v851 = vpack.c.b16 %v830, %v829
        %v852 = vpack.c.b16 %v832, %v831
        %v853 = vpack.c.b16 %v834, %v833
        %v854 = vpack.c.b16 %v836, %v835
        %v855 = vpack.c.b16 %v838, %v837
        %v856 = vpack.c.b16 %v840, %v839
        %873 = vmatprep.subr.bf16.mxu0 0
        %874 = vmatpush1.bf16.msra.mxu0 %v848
        %875 = vmatprep.subr.bf16.mxu0 0
        %876 = vmatpush1.bf16.msra.mxu0 %v847
        %877 = vmatprep.subr.bf16.mxu0 0
        %878 = vmatpush1.bf16.msra.mxu0 %v846
        %879 = vmatprep.subr.bf16.mxu0 0
        %880 = vmatpush1.bf16.msra.mxu0 %v845
        %881 = vmatprep.subr.bf16.mxu0 0
        %882 = vmatpush1.bf16.msra.mxu0 %v844
        %883 = vmatprep.subr.bf16.mxu0 0
        %884 = vmatpush1.bf16.msra.mxu0 %v843
        %885 = vmatprep.subr.bf16.mxu0 0
        %886 = vmatpush1.bf16.msra.mxu0 %v842
        %887 = vmatprep.subr.bf16.mxu0 0
        %888 = vmatpush1.bf16.msra.mxu0 %v841
        %889 = vmatprep.subr.bf16.mxu0 0
        %890 = vmatpush2.bf16.msra.mxu0 %v856
        %891 = vmatprep.subr.bf16.mxu0 0
        %892 = vmatpush2.bf16.msra.mxu0 %v855
        %893 = vmatprep.subr.bf16.mxu0 0
        %894 = vmatpush2.bf16.msra.mxu0 %v854
        %895 = vmatprep.subr.bf16.mxu0 0
        %896 = vmatpush2.bf16.msra.mxu0 %v853
        %897 = vmatprep.subr.bf16.mxu0 0
        %898 = vmatpush2.bf16.msra.mxu0 %v852
        %899 = vmatprep.subr.bf16.mxu0 0
        %900 = vmatpush2.bf16.msra.mxu0 %v851
        %901 = vmatprep.subr.bf16.mxu0 0
        %902 = vmatpush2.bf16.msra.mxu0 %v850
        %903 = vmatprep.subr.bf16.mxu0 0
        %904 = vmatpush2.bf16.msra.mxu0 %v849
        %905 = vmatprep.mubr.bf16.mxu0 %v730
        %906 = vmatmul.mubr.bf16.gmra.mxu0 %v729
        %v907 = vpop.f32.mrf.mxu0
        %v908 = vadd.f32 0.0, %v907
        %v909 = vpop.f32.mrf.mxu0
        %v910 = vpop.f32.mrf.mxu0
        %v911 = vadd.f32 0.0, %v910
        %v912 = vpop.f32.mrf.mxu0
        %913 = vmatprep.mubr.bf16.mxu0 %v732
        %914 = vmatmul.mubr.bf16.gmra.mxu0 %v731
        %v915 = vpop.f32.mrf.mxu0
        %v916 = vadd.f32 0.0, %v915
        %v917 = vpop.f32.mrf.mxu0
        %v918 = vpop.f32.mrf.mxu0
        %v919 = vadd.f32 0.0, %v918
        %v920 = vpop.f32.mrf.mxu0
        %921 = vmatprep.mubr.bf16.mxu0 %v734
        %922 = vmatmul.mubr.bf16.gmra.mxu0 %v733
        %v923 = vpop.f32.mrf.mxu0
        %v924 = vadd.f32 0.0, %v923
        %v925 = vpop.f32.mrf.mxu0
        %v926 = vpop.f32.mrf.mxu0
        %v927 = vadd.f32 0.0, %v926
        %v928 = vpop.f32.mrf.mxu0
        %929 = vmatprep.mubr.bf16.mxu0 %v736
        %930 = vmatmul.mubr.bf16.gmra.mxu0 %v735
        %v931 = vpop.f32.mrf.mxu0
        %v932 = vadd.f32 0.0, %v931
        %v933 = vpop.f32.mrf.mxu0
        %v934 = vpop.f32.mrf.mxu0
        %v935 = vadd.f32 0.0, %v934
        %v936 = vpop.f32.mrf.mxu0
        %937 = vmatprep.mubr.bf16.mxu0 %v738
        %938 = vmatmul.mubr.bf16.gmra.mxu0 %v737
        %v939 = vpop.f32.mrf.mxu0
        %v940 = vadd.f32 0.0, %v939
        %v941 = vpop.f32.mrf.mxu0
        %v942 = vpop.f32.mrf.mxu0
        %v943 = vadd.f32 0.0, %v942
        %v944 = vpop.f32.mrf.mxu0
        %945 = vmatprep.mubr.bf16.mxu0 %v740
        %946 = vmatmul.mubr.bf16.gmra.mxu0 %v739
        %v947 = vpop.f32.mrf.mxu0
        %v948 = vadd.f32 0.0, %v947
        %v949 = vpop.f32.mrf.mxu0
        %v950 = vpop.f32.mrf.mxu0
        %v951 = vadd.f32 0.0, %v950
        %v952 = vpop.f32.mrf.mxu0
        %953 = vmatprep.mubr.bf16.mxu0 %v742
        %954 = vmatmul.mubr.bf16.gmra.mxu0 %v741
        %v955 = vpop.f32.mrf.mxu0
        %v956 = vadd.f32 0.0, %v955
        %v957 = vpop.f32.mrf.mxu0
        %v958 = vpop.f32.mrf.mxu0
        %v959 = vadd.f32 0.0, %v958
        %v960 = vpop.f32.mrf.mxu0
        %961 = vmatprep.mubr.bf16.mxu0 %v744
        %962 = vmatmul.mubr.bf16.gmra.mxu0 %v743
        %v963 = vpop.f32.mrf.mxu0
        %v964 = vadd.f32 0.0, %v963
        %v965 = vpop.f32.mrf.mxu0
        %v966 = vpop.f32.mrf.mxu0
        %v967 = vadd.f32 0.0, %v966
        %v968 = vpop.f32.mrf.mxu0
        %969 = vdwg.mxu0
        %v970 = vadd.f32 %v713, %v908
        %v971 = vadd.f32 %v714, %v911
        %v972 = vadd.f32 %v715, %v916
        %v973 = vadd.f32 %v716, %v919
        %v974 = vadd.f32 %v717, %v924
        %v975 = vadd.f32 %v718, %v927
        %v976 = vadd.f32 %v719, %v932
        %v977 = vadd.f32 %v720, %v935
        %v978 = vadd.f32 %v721, %v940
        %v979 = vadd.f32 %v722, %v943
        %v980 = vadd.f32 %v723, %v948
        %v981 = vadd.f32 %v724, %v951
        %v982 = vadd.f32 %v725, %v956
        %v983 = vadd.f32 %v726, %v959
        %v984 = vadd.f32 %v727, %v964
        %v985 = vadd.f32 %v728, %v967
        %986 = vst [vmem:[#allocation2] sm:$0xff] %v970
        %987 = vst [vmem:[#allocation2 + $0x8] sm:$0xff] %v971
        %988 = vst [vmem:[#allocation2 + $0x10] sm:$0xff] %v972
        %989 = vst [vmem:[#allocation2 + $0x18] sm:$0xff] %v973
        %990 = vst [vmem:[#allocation2 + $0x20] sm:$0xff] %v974
        %991 = vst [vmem:[#allocation2 + $0x28] sm:$0xff] %v975
        %992 = vst [vmem:[#allocation2 + $0x30] sm:$0xff] %v976
        %993 = vst [vmem:[#allocation2 + $0x38] sm:$0xff] %v977
        %994 = vst [vmem:[#allocation2 + $0x40] sm:$0xff] %v978
        %995 = vst [vmem:[#allocation2 + $0x48] sm:$0xff] %v979
        %996 = vst [vmem:[#allocation2 + $0x50] sm:$0xff] %v980
        %997 = vst [vmem:[#allocation2 + $0x58] sm:$0xff] %v981
        %998 = vst [vmem:[#allocation2 + $0x60] sm:$0xff] %v982
        %999 = vst [vmem:[#allocation2 + $0x68] sm:$0xff] %v983
        %1000 = vst [vmem:[#allocation2 + $0x70] sm:$0xff] %v984
        %1001 = vst [vmem:[#allocation2 + $0x78] sm:$0xff] %v985
        %p1002 = scmp.eq.s32.totalorder %s33, 1
        // Predicated region
        $region61: #{tpu_custom_call.1} parent=39 // pred_check
          %p1003 = pneg %p1002
        $region62: #{tpu_custom_call.1} parent=39 // pred_check_branch
          %1005 = sbr.rel (%p1003) target = $region64
        $region63: #{tpu_custom_call.1} parent=39 // pred_region
          %v1006 = vld [vmem:[#allocation2] sm:$0xff]
          %v1007 = vld [vmem:[#allocation2 + $0x8] sm:$0xff]
          %v1008 = vld [vmem:[#allocation2 + $0x10] sm:$0xff]
          %v1009 = vld [vmem:[#allocation2 + $0x18] sm:$0xff]
          %v1010 = vld [vmem:[#allocation2 + $0x20] sm:$0xff]
          %v1011 = vld [vmem:[#allocation2 + $0x28] sm:$0xff]
          %v1012 = vld [vmem:[#allocation2 + $0x30] sm:$0xff]
          %v1013 = vld [vmem:[#allocation2 + $0x38] sm:$0xff]
          %v1014 = vld [vmem:[#allocation2 + $0x40] sm:$0xff]
          %v1015 = vld [vmem:[#allocation2 + $0x48] sm:$0xff]
          %v1016 = vld [vmem:[#allocation2 + $0x50] sm:$0xff]
          %v1017 = vld [vmem:[#allocation2 + $0x58] sm:$0xff]
          %v1018 = vld [vmem:[#allocation2 + $0x60] sm:$0xff]
          %v1019 = vld [vmem:[#allocation2 + $0x68] sm:$0xff]
          %v1020 = vld [vmem:[#allocation2 + $0x70] sm:$0xff]
          %v1021 = vld [vmem:[#allocation2 + $0x78] sm:$0xff]
          %v1022 = vld [vmem:[%s4] sm:$0x1]
          %v1024 = vlaneseq
          %v1025 = vshrl.u32 %v1024, 7
          %v1026 = vsub.s32 0, %v1025
          %v1027 = vrot.slane %v1022, %v1026
          %v1029 = vadd.f32 %v1006, %v1027
          %v1030 = vadd.f32 %v1007, %v1027
          %v1031 = vadd.f32 %v1008, %v1027
          %v1032 = vadd.f32 %v1009, %v1027
          %v1033 = vadd.f32 %v1010, %v1027
          %v1034 = vadd.f32 %v1011, %v1027
          %v1035 = vadd.f32 %v1012, %v1027
          %v1036 = vadd.f32 %v1013, %v1027
          %v1037 = vadd.f32 %v1014, %v1027
          %v1038 = vadd.f32 %v1015, %v1027
          %v1039 = vadd.f32 %v1016, %v1027
          %v1040 = vadd.f32 %v1017, %v1027
          %v1041 = vadd.f32 %v1018, %v1027
          %v1042 = vadd.f32 %v1019, %v1027
          %v1043 = vadd.f32 %v1020, %v1027
          %v1044 = vadd.f32 %v1021, %v1027
          %1045 = vst [vmem:[%s369] sm:$0xff] %v1029
          %1046 = vst [vmem:[%s369 + $0x8] sm:$0xff] %v1030
          %1047 = vst [vmem:[%s369 + $0x10] sm:$0xff] %v1031
          %1048 = vst [vmem:[%s369 + $0x18] sm:$0xff] %v1032
          %1049 = vst [vmem:[%s369 + $0x20] sm:$0xff] %v1033
          %1050 = vst [vmem:[%s369 + $0x28] sm:$0xff] %v1034
          %1051 = vst [vmem:[%s369 + $0x30] sm:$0xff] %v1035
          %1052 = vst [vmem:[%s369 + $0x38] sm:$0xff] %v1036
          %1053 = vst [vmem:[%s369 + $0x40] sm:$0xff] %v1037
          %1054 = vst [vmem:[%s369 + $0x48] sm:$0xff] %v1038
          %1055 = vst [vmem:[%s369 + $0x50] sm:$0xff] %v1039
          %1056 = vst [vmem:[%s369 + $0x58] sm:$0xff] %v1040
          %1057 = vst [vmem:[%s369 + $0x60] sm:$0xff] %v1041
          %1058 = vst [vmem:[%s369 + $0x68] sm:$0xff] %v1042
          %1059 = vst [vmem:[%s369 + $0x70] sm:$0xff] %v1043
          %1060 = vst [vmem:[%s369 + $0x78] sm:$0xff] %v1044
        $region64: #{tpu_custom_call.1} parent=39 // pred_fallthru
          _
        %s1061 = sand.u32 %s173, 1
        %s1062 = scalar_lea.sflag [#allocation5], %s1061
        %s1063 = sand.u32 %s173, 1
        %s1064 = smul.addr %s1063, 128
        %s1065 = scalar_lea.vmem [#allocation11], %s1064
        // Predicated region
        $region65: #{tpu_custom_call.1} parent=39 // pred_check
          %p1066 = pneg %p183
        $region66: #{tpu_custom_call.1} parent=39 // pred_check_branch
          %1068 = sbr.rel (%p1066) target = $region68
        $region67: #{tpu_custom_call.1} parent=39 // pred_region
          %s1069 = smul.u32 16, %s32
          %s1071 = ssub.s32 2048, 2048
          %1072 = vsyncadd %s1062, %s1071
          %s1073 = smul.addr %s1069, 128
          %s1074 = scalar_lea.hbm %s5, %s1073
          %s1075 = sshll.u32 %s1065, 4
          %s1076 = int_to_ptr.vmem [resolvable:$true] %s1075
          %1081 = dma.vmem_to_hbm [thread:$0]  %s1076, 2048, %s1074, %s1062, 128, 128, 8
        $region68: #{tpu_custom_call.1} parent=39 // pred_fallthru
          _
      $region40: #{tpu_custom_call.1} parent=5 // pred_fallthru
        _
      %p1082 = scmp.le.s32.totalorder 2, %s23
      // Predicated region
      $region69: #{tpu_custom_call.1} parent=5 // pred_check
        %p1083 = pneg %p1082
      $region70: #{tpu_custom_call.1} parent=5 // pred_check_branch
        %1085 = sbr.rel (%p1083) target = $region72
      $region71: #{tpu_custom_call.1} parent=5 // pred_region
        %s1086 = ssub.s32 %s23, 2
        // Predicated region
        $region73: #{tpu_custom_call.1} parent=71 // pred_check
          %p1087 = pneg %p189
        $region74: #{tpu_custom_call.1} parent=71 // pred_check_branch
          %1089 = sbr.rel (%p1087) target = $region76
        $region75: #{tpu_custom_call.1} parent=71 // pred_region
          %s1090 = sand.u32 %s174, 1
          %s1091 = scalar_lea.sflag [#allocation5], %s1090
          %s1092 = sand.u32 %s174, 1
          %s1093 = smul.addr %s1092, 128
          %s1094 = scalar_lea.vmem [#allocation11], %s1093
          %1095 = dma.done %s1091, 2048
        $region76: #{tpu_custom_call.1} parent=71 // pred_fallthru
          _
      $region72: #{tpu_custom_call.1} parent=5 // pred_fallthru
        _
    $region6: #{tpu_custom_call.1} parent=1 // loop_footer
      %s27 = sadd.s32 1, %s23
    $region7: #{tpu_custom_call.1} parent=1 // loop_footer_branch
      %22 = sbr.rel target = $region3
    $region8: #{tpu_custom_call.1} parent=1 // loop_exit
      _
    %1096 = vsyncpa [#allocation4], 1
    %s1097 = scalar_lea.sflag [#allocation4], 1
    %1098 = vsyncpa %s1097, 1
    %1099 = vsyncpa [#allocation7], 1
    %s1100 = scalar_lea.sflag [#allocation7], 1
    %1101 = vsyncpa %s1100, 1
    %1102 = vsyncpa [#allocation10], 1
    %s1103 = scalar_lea.sflag [#allocation10], 1
    %1104 = vsyncpa %s1103, 1
    %1105 = vsyncpa [#allocation5], 1
    %s1106 = scalar_lea.sflag [#allocation5], 1
    %1107 = vsyncpa %s1106, 1

</llo_original>
